<compile_context>
chip_gen: v5e
topology: v5e:2x2
jax: 0.10.0
libtpu: 0.0.40
codegen_flags: <defaults>
</compile_context>

<pallas_src>
import jax
import jax.numpy as jnp
from jax.experimental import pallas as pl
from jax.experimental.pallas import tpu as pltpu

_LANE = 128
_SUBLANE = 8
_OUT_PAD = _LANE                      # arc classifier's 2 outputs, padded to a lane width
_VMEM_LIMIT = 32 * 1024 * 1024        # safe scoped cap on v5e/v6e/v7x
_RESIDENT_BUDGET = 24 * 1024 * 1024   # headroom under the scoped cap for the resident path


def _round_up(x, m):
    return ((x + m - 1) // m) * m


def _row_tile(n_rows):
    """Row tile: big enough to feed a 256x256 MXU, small enough that large
    batches still split into >=2 row tiles (megacore sharding on v7x)."""
    if n_rows <= 256:
        return _round_up(max(n_rows, 1), _SUBLANE)
    return 256


# --------------------------------------------------------------------------
# Kernels
# --------------------------------------------------------------------------

def _arc_fused_resident_kernel(x_ref, wb_ref, bb_ref, wa_ref, ba_ref,
                               feat_ref, logits_ref):
    """feat = relu(x @ Wb + bb); logits = feat @ Wa + ba.

    Single grid axis over row tiles.  Wb / Wa / biases use constant index maps
    so they are DMA'd once and stay VMEM-resident across row tiles.
    """
    feat = jnp.dot(x_ref[...].astype(jnp.bfloat16), wb_ref[...],
                   preferred_element_type=jnp.float32)
    feat = jnp.maximum(feat + bb_ref[...], 0.0)            # f32 epilogue
    feat_ref[...] = feat.astype(feat_ref.dtype)
    logits = jnp.dot(feat.astype(jnp.bfloat16), wa_ref[...],
                     preferred_element_type=jnp.float32) + ba_ref[...]
    logits_ref[...] = logits.astype(logits_ref.dtype)


def _arc_fused_ktiled_kernel(x_ref, wb_ref, bb_ref, wa_ref, ba_ref,
                             feat_ref, logits_ref, acc_ref):
    """K-tiled fallback for very large in_dim: grid = (row tiles, K tiles).

    The contraction axis is last ("arbitrary"); acc_ref is the f32 accumulator
    living across the K loop.
    """
    k = pl.program_id(1)

    @pl.when(k == 0)
    def _():
        acc_ref[...] = jnp.zeros_like(acc_ref)

    acc_ref[...] += jnp.dot(x_ref[...].astype(jnp.bfloat16), wb_ref[...],
                            preferred_element_type=jnp.float32)

    @pl.when(k == pl.num_programs(1) - 1)
    def _():
        feat = jnp.maximum(acc_ref[...] + bb_ref[...], 0.0)
        feat_ref[...] = feat.astype(feat_ref.dtype)
        logits = jnp.dot(feat.astype(jnp.bfloat16), wa_ref[...],
                         preferred_element_type=jnp.float32) + ba_ref[...]
        logits_ref[...] = logits.astype(logits_ref.dtype)


def _arc_fc_kernel(feat_ref, wa_ref, ba_ref, logits_ref):
    """only_fc=True path: x is already the (lane-padded) feature tensor."""
    logits = jnp.dot(feat_ref[...].astype(jnp.bfloat16), wa_ref[...],
                     preferred_element_type=jnp.float32) + ba_ref[...]
    logits_ref[...] = logits.astype(logits_ref.dtype)


# --------------------------------------------------------------------------
# Pure-JAX epilogue (pairwise ranking logits / targets) — trivially cheap
# --------------------------------------------------------------------------

def _compute_rank_outputs(logits, targets):
    """Matches RankUp.compute_rank_logits: pairwise diffs + 2-way one-hot."""
    n = logits.shape[0]
    logits_mat = (logits[jnp.newaxis, :, :] - logits[:, jnp.newaxis, :]).reshape(n * n, 2)
    if targets is None:
        return logits_mat, None
    t = targets.astype(jnp.float32)
    tmat = ((1.0 + jnp.sign(t[jnp.newaxis, :] - t[:, jnp.newaxis])) * 0.5).reshape(n * n)
    targets_onehot = jnp.stack([tmat, 1.0 - tmat], axis=1)
    return logits_mat, targets_onehot


# --------------------------------------------------------------------------
# Module wrapper
# --------------------------------------------------------------------------

class RankUpPallas:
    """JAX/Pallas port of RankUp's forward (use_arc=True paths)."""

    def __init__(self, in_dim, num_features, key):
        k1, k2, k3, k4 = jax.random.split(key, 4)
        self.in_dim = in_dim
        self.num_features = num_features
        self.k_pad = _round_up(in_dim, _LANE)
        self.f_pad = _round_up(num_features, _LANE)

        # Synthetic backbone: Linear(in_dim, num_features) + ReLU.
        # Stored (in, out), bf16, zero-padded to lane widths (lane-dense MXU tiles).
        wb = jax.random.normal(k1, (in_dim, num_features), jnp.float32) * 0.02
        self.wb = (jnp.zeros((self.k_pad, self.f_pad), jnp.bfloat16)
                   .at[:in_dim, :num_features].set(wb.astype(jnp.bfloat16)))
        bb = jax.random.normal(k3, (num_features,), jnp.float32) * 0.01
        self.bb = jnp.zeros((1, self.f_pad), jnp.float32).at[0, :num_features].set(bb)

        # arc_classifier = nn.Linear(num_features, 2), zero-padded to (f_pad, 128).
        wa = jax.random.normal(k2, (num_features, 2), jnp.float32) * 0.02
        self.wa = (jnp.zeros((self.f_pad, _OUT_PAD), jnp.bfloat16)
                   .at[:num_features, :2].set(wa.astype(jnp.bfloat16)))
        ba = jax.random.normal(k4, (2,), jnp.float32) * 0.01
        self.ba = jnp.zeros((1, _OUT_PAD), jnp.float32).at[0, :2].set(ba)

    # ---- Pallas call sites -------------------------------------------------

    def _backbone_and_arc(self, x_flat):
        n, k_in = x_flat.shape
        tm = _row_tile(n)
        m_pad = _round_up(n, tm)
        x_pad = x_flat
        if (m_pad, self.k_pad) != (n, k_in):
            x_pad = jnp.pad(x_flat, ((0, m_pad - n), (0, self.k_pad - k_in)))
        grid_rows = m_pad // tm
        x_bytes = x_pad.dtype.itemsize

        flops = 2 * m_pad * self.k_pad * self.f_pad + 2 * m_pad * self.f_pad * _OUT_PAD
        bytes_accessed = (x_pad.size * x_bytes + self.wb.size * 2 + self.bb.size * 4
                          + self.wa.size * 2 + self.ba.size * 4
                          + m_pad * self.f_pad * 4 + m_pad * _OUT_PAD * 4)
        cost = pl.CostEstimate(flops=flops, transcendentals=0,
                               bytes_accessed=bytes_accessed)

        out_shape = (jax.ShapeDtypeStruct((m_pad, self.f_pad), jnp.float32),
                     jax.ShapeDtypeStruct((m_pad, _OUT_PAD), jnp.float32))
        # TODO(synk): emit feat in bf16 if downstream consumers tolerate it —
        # halves the largest writeback stream; kept f32 to match torch output.

        # Double-buffered footprint of the resident (no K grid axis) path.
        resident_footprint = (2 * tm * self.k_pad * x_bytes            # x tiles
                              + self.k_pad * self.f_pad * 2            # Wb (resident)
                              + self.f_pad * _OUT_PAD * 2              # Wa (resident)
                              + 2 * tm * self.f_pad * 4                # feat out tiles
                              + 2 * tm * _OUT_PAD * 4)                 # logits out tiles

        if resident_footprint <= _RESIDENT_BUDGET:
            # Wb fits VMEM: single read of Wb, no accumulator, no K loop.
            feat_pad, logits_pad = pl.pallas_call(
                _arc_fused_resident_kernel,
                out_shape=out_shape,
                grid=(grid_rows,),
                in_specs=[
                    pl.BlockSpec((tm, self.k_pad), lambda i: (i, 0)),          # x
                    pl.BlockSpec((self.k_pad, self.f_pad), lambda i: (0, 0)),  # Wb (resident)
                    pl.BlockSpec((1, self.f_pad), lambda i: (0, 0)),           # bb
                    pl.BlockSpec((self.f_pad, _OUT_PAD), lambda i: (0, 0)),    # Wa
                    pl.BlockSpec((1, _OUT_PAD), lambda i: (0, 0)),             # ba
                ],
                out_specs=(
                    pl.BlockSpec((tm, self.f_pad), lambda i: (i, 0)),          # feat
                    pl.BlockSpec((tm, _OUT_PAD), lambda i: (i, 0)),            # logits
                ),
                compiler_params=pltpu.CompilerParams(
                    dimension_semantics=("parallel",),
                    vmem_limit_bytes=_VMEM_LIMIT),
                cost_estimate=cost,
            )(x_pad, self.wb, self.bb, self.wa, self.ba)
        else:
            # Huge in_dim: tile the contraction axis with a large tk divisor.
            tk = max(t for t in (2048, 1024, 512, 256, 128) if self.k_pad % t == 0)
            feat_pad, logits_pad = pl.pallas_call(
                _arc_fused_ktiled_kernel,
                out_shape=out_shape,
                grid=(grid_rows, self.k_pad // tk),
                in_specs=[
                    pl.BlockSpec((tm, tk), lambda i, k: (i, k)),               # x
                    pl.BlockSpec((tk, self.f_pad), lambda i, k: (k, 0)),       # Wb
                    pl.BlockSpec((1, self.f_pad), lambda i, k: (0, 0)),        # bb
                    pl.BlockSpec((self.f_pad, _OUT_PAD), lambda i, k: (0, 0)),  # Wa
                    pl.BlockSpec((1, _OUT_PAD), lambda i, k: (0, 0)),          # ba
                ],
                out_specs=(
                    pl.BlockSpec((tm, self.f_pad), lambda i, k: (i, 0)),       # feat
                    pl.BlockSpec((tm, _OUT_PAD), lambda i, k: (i, 0)),         # logits
                ),
                scratch_shapes=[pltpu.VMEM((tm, self.f_pad), jnp.float32)],
                compiler_params=pltpu.CompilerParams(
                    dimension_semantics=("parallel", "arbitrary"),
                    vmem_limit_bytes=_VMEM_LIMIT),
                cost_estimate=cost,
            )(x_pad, self.wb, self.bb, self.wa, self.ba)

        feat = feat_pad[:n, :self.num_features]
        logits = logits_pad[:n, :2]
        return feat, logits

    def _arc_logits_only_fc(self, feat):
        n, f = feat.shape
        if f > self.f_pad:
            raise ValueError("feature width exceeds the padded classifier width")
        tm = _row_tile(n)
        m_pad = _round_up(n, tm)
        feat_pad = feat
        if (m_pad, self.f_pad) != (n, f):
            feat_pad = jnp.pad(feat, ((0, m_pad - n), (0, self.f_pad - f)))
        grid_rows = m_pad // tm

        cost = pl.CostEstimate(
            flops=2 * m_pad * self.f_pad * _OUT_PAD,
            transcendentals=0,
            bytes_accessed=(feat_pad.size * feat_pad.dtype.itemsize
                            + self.wa.size * 2 + self.ba.size * 4
                            + m_pad * _OUT_PAD * 4))

        logits_pad = pl.pallas_call(
            _arc_fc_kernel,
            out_shape=jax.ShapeDtypeStruct((m_pad, _OUT_PAD), jnp.float32),
            grid=(grid_rows,),
            in_specs=[
                pl.BlockSpec((tm, self.f_pad), lambda i: (i, 0)),              # feat
                pl.BlockSpec((self.f_pad, _OUT_PAD), lambda i: (0, 0)),        # Wa (resident)
                pl.BlockSpec((1, _OUT_PAD), lambda i: (0, 0)),                 # ba
            ],
            out_specs=pl.BlockSpec((tm, _OUT_PAD), lambda i: (i, 0)),
            compiler_params=pltpu.CompilerParams(
                dimension_semantics=("parallel",),
                vmem_limit_bytes=_VMEM_LIMIT),
            cost_estimate=cost,
        )(feat_pad, self.wa, self.ba)
        return logits_pad[:n, :2]

    # ---- forward -----------------------------------------------------------

    def __call__(self, x, use_arc=False, only_fc=False, targets=None):
        if not use_arc:
            # TODO(synk): use_arc=False delegates to the external backbone's own
            # forward (its classifier head) — not part of RankUp's compute.
            raise NotImplementedError("use_arc=False path delegates to backbone")

        if only_fc:
            logits = self._arc_logits_only_fc(x)
            logits_mat, targets_onehot = _compute_rank_outputs(logits, targets)
            return {'logits': logits_mat, 'targets': targets_onehot}

        n = x.shape[0]
        x_flat = x.reshape(n, -1)            # keep native dtype; bf16 cast is in-kernel
        feat, logits = self._backbone_and_arc(x_flat)
        logits_mat, targets_onehot = _compute_rank_outputs(logits, targets)
        return {'logits': logits_mat, 'feat': feat, 'targets': targets_onehot}


if __name__ == "__main__":
    key = jax.random.PRNGKey(0)
    kx, kt, kp = jax.random.split(key, 3)

    N, C, H, W = 2, 4, 16, 16          # small NCHW input
    F = 32                             # backbone.num_features
    x = jax.random.normal(kx, (N, C, H, W), jnp.float32)
    targets = jax.random.uniform(kt, (N,), jnp.float32)

    model = RankUpPallas(C * H * W, F, kp)

    # use_arc=True, only_fc=False path (fused backbone + ARC kernel)
    out = model(x, use_arc=True, only_fc=False, targets=targets)
    jax.block_until_ready(out)

    # pure-JAX reference mirroring torch semantics (bf16 MXU operands,
    # f32 accumulation — same numerics as the kernel).
    in_dim = C * H * W
    x_flat = x.reshape(N, -1)
    x_bf = x_flat.astype(jnp.bfloat16).astype(jnp.float32)
    wb_f = model.wb[:in_dim, :F].astype(jnp.float32)
    feat_ref = jnp.maximum(x_bf @ wb_f + model.bb[:, :F], 0.0)
    feat_bf = feat_ref.astype(jnp.bfloat16).astype(jnp.float32)
    wa_f = model.wa[:F, :2].astype(jnp.float32)
    logits_ref = feat_bf @ wa_f + model.ba[:, :2]
    lm_ref = (logits_ref[None, :, :] - logits_ref[:, None, :]).reshape(N * N, 2)
    tm_ref = ((1.0 + jnp.sign(targets[None, :] - targets[:, None])) / 2.0).reshape(N * N)
    onehot_ref = jnp.stack([tm_ref, 1.0 - tm_ref], axis=1)

    assert jnp.allclose(out['feat'], feat_ref, atol=2e-3), "feat mismatch"
    assert jnp.allclose(out['logits'], lm_ref, atol=2e-3), "logits_mat mismatch"
    assert jnp.allclose(out['targets'], onehot_ref, atol=1e-6), "targets_mat mismatch"

    # use_arc=True, only_fc=True path (x is already the feature tensor)
    out_fc = model(feat_ref, use_arc=True, only_fc=True, targets=targets)
    jax.block_until_ready(out_fc)
    assert jnp.allclose(out_fc['logits'], lm_ref, atol=2e-3)
    assert jnp.allclose(out_fc['targets'], onehot_ref, atol=1e-6)

    # no-targets path: the targets matrix is skipped entirely
    out_nt = model(x, use_arc=True, only_fc=False, targets=None)
    jax.block_until_ready(out_nt['logits'])
    assert out_nt['targets'] is None

    print("KERNEL_OK")
</pallas_src>

<mosaic_0001>
module attributes {stable_mosaic.version = 11 : i64} {
  func.func @_arc_fused_resident_kernel(%arg0: i32, %arg1: memref<8x1024xf32, #tpu.memory_space<vmem>>, %arg2: memref<1024x128xbf16, #tpu.memory_space<vmem>>, %arg3: memref<1x128xf32, #tpu.memory_space<vmem>>, %arg4: memref<128x128xbf16, #tpu.memory_space<vmem>>, %arg5: memref<1x128xf32, #tpu.memory_space<vmem>>, %arg6: memref<8x128xf32, #tpu.memory_space<vmem>>, %arg7: memref<8x128xf32, #tpu.memory_space<vmem>>) attributes {dimension_semantics = [#tpu.dimension_semantics<parallel>], iteration_bounds = array<i64: 1>, scalar_prefetch = 0 : i64, scratch_operands = 0 : i64, tpu.core_type = #tpu.core_type<tc>, window_params = [{transform_indices = @transform_0, window_bounds = array<i64: 8, 1024>}, {pipeline_mode = #tpu.pipeline_mode<synchronous>, transform_indices = @transform_1, window_bounds = array<i64: 1024, 128>}, {pipeline_mode = #tpu.pipeline_mode<synchronous>, transform_indices = @transform_2, window_bounds = array<i64: 1, 128>}, {pipeline_mode = #tpu.pipeline_mode<synchronous>, transform_indices = @transform_3, window_bounds = array<i64: 128, 128>}, {pipeline_mode = #tpu.pipeline_mode<synchronous>, transform_indices = @transform_4, window_bounds = array<i64: 1, 128>}, {transform_indices = @transform_5, window_bounds = array<i64: 8, 128>}, {transform_indices = @transform_6, window_bounds = array<i64: 8, 128>}]} {
    %c0 = arith.constant 0 : index
    %c0_0 = arith.constant 0 : index
    %0 = vector.load %arg1[%c0, %c0_0] : memref<8x1024xf32, #tpu.memory_space<vmem>>, vector<8x1024xf32>
    %1 = arith.truncf %0 : vector<8x1024xf32> to vector<8x1024xbf16>
    %c0_1 = arith.constant 0 : index
    %c0_2 = arith.constant 0 : index
    %2 = vector.load %arg2[%c0_1, %c0_2] : memref<1024x128xbf16, #tpu.memory_space<vmem>>, vector<1024x128xbf16>
    %cst = arith.constant dense<0.000000e+00> : vector<8x128xf32>
    %3 = tpu.matmul %1, %2, %cst {dimension_numbers = #tpu.dot_dimension_numbers<[1], [0], [0], [1], [0, 0, 1, 1], [], []>} : vector<8x1024xbf16>, vector<1024x128xbf16>, vector<8x128xf32> -> vector<8x128xf32>
    %c0_3 = arith.constant 0 : index
    %c0_4 = arith.constant 0 : index
    %4 = vector.load %arg3[%c0_3, %c0_4] : memref<1x128xf32, #tpu.memory_space<vmem>>, vector<1x128xf32>
    %5 = vector.broadcast %4 : vector<1x128xf32> to vector<8x128xf32>
    %6 = arith.addf %3, %5 : vector<8x128xf32>
    %cst_5 = arith.constant 0.000000e+00 : f32
    %7 = vector.broadcast %cst_5 : f32 to vector<8x128xf32>
    %8 = arith.maximumf %6, %7 : vector<8x128xf32>
    %c0_6 = arith.constant 0 : index
    %c0_7 = arith.constant 0 : index
    %9 = vector.load %arg6[%c0_6, %c0_7] : memref<8x128xf32, #tpu.memory_space<vmem>>, vector<8x128xf32>
    tpu.vector_store %arg6[%c0_6, %c0_7], %8 {strides = array<i32>} : memref<8x128xf32, #tpu.memory_space<vmem>>, vector<8x128xf32>,
    %10 = arith.truncf %8 : vector<8x128xf32> to vector<8x128xbf16>
    %c0_8 = arith.constant 0 : index
    %c0_9 = arith.constant 0 : index
    %11 = vector.load %arg4[%c0_8, %c0_9] : memref<128x128xbf16, #tpu.memory_space<vmem>>, vector<128x128xbf16>
    %cst_10 = arith.constant dense<0.000000e+00> : vector<8x128xf32>
    %12 = tpu.matmul %10, %11, %cst_10 {dimension_numbers = #tpu.dot_dimension_numbers<[1], [0], [0], [1], [0, 0, 1, 1], [], []>} : vector<8x128xbf16>, vector<128x128xbf16>, vector<8x128xf32> -> vector<8x128xf32>
    %c0_11 = arith.constant 0 : index
    %c0_12 = arith.constant 0 : index
    %13 = vector.load %arg5[%c0_11, %c0_12] : memref<1x128xf32, #tpu.memory_space<vmem>>, vector<1x128xf32>
    %14 = vector.broadcast %13 : vector<1x128xf32> to vector<8x128xf32>
    %15 = arith.addf %12, %14 : vector<8x128xf32>
    %c0_13 = arith.constant 0 : index
    %c0_14 = arith.constant 0 : index
    %16 = vector.load %arg7[%c0_13, %c0_14] : memref<8x128xf32, #tpu.memory_space<vmem>>, vector<8x128xf32>
    tpu.vector_store %arg7[%c0_13, %c0_14], %15 {strides = array<i32>} : memref<8x128xf32, #tpu.memory_space<vmem>>, vector<8x128xf32>,
    return
  }
  func.func @transform_0(%arg0: i32) -> (i32, i32) {
    %c0_i32 = arith.constant 0 : i32
    %c0_i32_0 = arith.constant 0 : i32
    return %arg0, %c0_i32 : i32, i32
  }
  func.func @transform_1(%arg0: i32) -> (i32, i32) {
    %c0_i32 = arith.constant 0 : i32
    %c0_i32_0 = arith.constant 0 : i32
    %c0_i32_1 = arith.constant 0 : i32
    return %c0_i32, %c0_i32_0 : i32, i32
  }
  func.func @transform_2(%arg0: i32) -> (i32, i32) {
    %c0_i32 = arith.constant 0 : i32
    %c0_i32_0 = arith.constant 0 : i32
    %c0_i32_1 = arith.constant 0 : i32
    return %c0_i32, %c0_i32_0 : i32, i32
  }
  func.func @transform_3(%arg0: i32) -> (i32, i32) {
    %c0_i32 = arith.constant 0 : i32
    %c0_i32_0 = arith.constant 0 : i32
    %c0_i32_1 = arith.constant 0 : i32
    return %c0_i32, %c0_i32_0 : i32, i32
  }
  func.func @transform_4(%arg0: i32) -> (i32, i32) {
    %c0_i32 = arith.constant 0 : i32
    %c0_i32_0 = arith.constant 0 : i32
    %c0_i32_1 = arith.constant 0 : i32
    return %c0_i32, %c0_i32_0 : i32, i32
  }
  func.func @transform_5(%arg0: i32) -> (i32, i32) {
    %c0_i32 = arith.constant 0 : i32
    %c0_i32_0 = arith.constant 0 : i32
    return %arg0, %c0_i32 : i32, i32
  }
  func.func @transform_6(%arg0: i32) -> (i32, i32) {
    %c0_i32 = arith.constant 0 : i32
    %c0_i32_0 = arith.constant 0 : i32
    return %arg0, %c0_i32 : i32, i32
  }
}

</mosaic_0001>

<llo_original>
// kernel: tpu_custom_call.1
$region0: #{tpu_custom_call.1}
  #allocation0 [shape = 'u32[]', space=smem, size = 0x4, offset = 0x4, fixed_abs, tag = 'smem constant byte address 0x4 - core index']
  #allocation1 [shape = 'u32[72,128]{1,0:T(1,128)}', space=vmem, size = 0x9000, scoped, tag = 'internal scratch']
  %s0 = inlined_call_operand.hbm [shape: f32[8,1024], index: 0, kind: input, shape index: {}]
  %s1 = inlined_call_operand.hbm [shape: bf16[1024,128], index: 1, kind: input, shape index: {}]
  %s2 = inlined_call_operand.vmem [shape: f32[1,128], index: 2, kind: input, shape index: {}]
  %s3 = inlined_call_operand.hbm [shape: bf16[128,128], index: 3, kind: input, shape index: {}]
  %s4 = inlined_call_operand.vmem [shape: f32[1,128], index: 4, kind: input, shape index: {}]
  %s5 = inlined_call_operand.hbm [shape: f32[8,128], index: 5, kind: output, shape index: {0}]
  %s6 = inlined_call_operand.hbm [shape: f32[8,128], index: 6, kind: output, shape index: {1}]
  %7 = xla_tuple %s5, %s6
  %s8 = sld [smem:[#allocation0]]
  $region50: #{tpu_custom_call.1} parent=0
    _
  %s10 = ssub.s32 1, %s8
  %s11 = scalar_select 0, %s10, %s8
  $region1: #{tpu_custom_call.1} parent=0
    #allocation2 [shape = 'u8[32768]{0}', space=vmem, size = 0x8000, scoped, tag = 'input window, operand 0, single buffered']
    #allocation3 [shape = 's32[1]{0}', space=sflag, size = 0x4, scoped, tag = 'scoped memory for tpu_custom_call.1']
    #allocation4 [shape = 's32[1]{0}', space=sflag, size = 0x4, scoped, tag = 'scoped memory for tpu_custom_call.1']
    #allocation5 [shape = 'u8[262144]{0}', space=vmem, size = 0x40000, scoped, tag = 'input window, operand 1, single buffered']
    #allocation6 [shape = 's32[1]{0}', space=sflag, size = 0x4, scoped, tag = 'scoped memory for tpu_custom_call.1']
    #allocation7 [shape = 'u8[32768]{0}', space=vmem, size = 0x8000, scoped, tag = 'input window, operand 3, single buffered']
    #allocation8 [shape = 'u8[4096]{0}', space=vmem, size = 0x1000, scoped, tag = 'output window, operand 0, single buffered']
    #allocation9 [shape = 'u8[4096]{0}', space=vmem, size = 0x1000, scoped, tag = 'output window, operand 1, single buffered']
    #allocation10 [shape = 's32[1]{0}', space=sflag, size = 0x4, scoped, tag = 'scoped memory for tpu_custom_call.1']
    %12 = vsyncpa [#allocation3], 0
    %13 = vsyncpa [#allocation6], 0
    %14 = vsyncpa [#allocation4], 0
    %15 = vsyncpa [#allocation10], 0
    // Predicated region
    $region2: #{tpu_custom_call.1} parent=1 // pred_check
      _
    $region3: #{tpu_custom_call.1} parent=1 // pred_check_branch
      %17 = sbr.rel (0) target = $region5
    $region4: #{tpu_custom_call.1} parent=1 // pred_region
      %19 = vsyncadd [#allocation3], 0
      %s21 = sshll.u32 %s0, 4
      %s22 = int_to_ptr.hbm [resolvable:$true] %s21
      %s23 = sshll.u32 [#allocation2], 4
      %s24 = int_to_ptr.vmem [resolvable:$true] %s23
      %26 = dma.hbm_to_vmem [thread:$0]  %s22, 1024, %s24, [#allocation3]
    $region5: #{tpu_custom_call.1} parent=1 // pred_fallthru
      _
    // Predicated region
    $region6: #{tpu_custom_call.1} parent=1 // pred_check
      _
    $region7: #{tpu_custom_call.1} parent=1 // pred_check_branch
      %28 = sbr.rel (0) target = $region9
    $region8: #{tpu_custom_call.1} parent=1 // pred_region
      %30 = vsyncadd [#allocation6], 0
      %s31 = sshll.u32 %s1, 4
      %s32 = int_to_ptr.hbm [resolvable:$true] %s31
      %s33 = sshll.u32 [#allocation5], 4
      %s34 = int_to_ptr.vmem [resolvable:$true] %s33
      %39 = dma.hbm_to_vmem [thread:$0]  %s32, 8192, %s34, [#allocation6], 64, 64, 4
    $region9: #{tpu_custom_call.1} parent=1 // pred_fallthru
      _
    // Predicated region
    $region10: #{tpu_custom_call.1} parent=1 // pred_check
      _
    $region11: #{tpu_custom_call.1} parent=1 // pred_check_branch
      %41 = sbr.rel (0) target = $region13
    $region12: #{tpu_custom_call.1} parent=1 // pred_region
      _
    $region13: #{tpu_custom_call.1} parent=1 // pred_fallthru
      _
    // Predicated region
    $region14: #{tpu_custom_call.1} parent=1 // pred_check
      _
    $region15: #{tpu_custom_call.1} parent=1 // pred_check_branch
      %43 = sbr.rel (0) target = $region17
    $region16: #{tpu_custom_call.1} parent=1 // pred_region
      %45 = vsyncadd [#allocation6], 0
      %s46 = sshll.u32 %s3, 4
      %s47 = int_to_ptr.hbm [resolvable:$true] %s46
      %s48 = sshll.u32 [#allocation7], 4
      %s49 = int_to_ptr.vmem [resolvable:$true] %s48
      %54 = dma.hbm_to_vmem [thread:$0]  %s47, 1024, %s49, [#allocation6], 64, 64, 4
    $region17: #{tpu_custom_call.1} parent=1 // pred_fallthru
      _
    // Predicated region
    $region18: #{tpu_custom_call.1} parent=1 // pred_check
      _
    $region19: #{tpu_custom_call.1} parent=1 // pred_check_branch
      %56 = sbr.rel (0) target = $region21
    $region20: #{tpu_custom_call.1} parent=1 // pred_region
      _
    $region21: #{tpu_custom_call.1} parent=1 // pred_fallthru
      _
    // Predicated region
    $region22: #{tpu_custom_call.1} parent=1 // pred_check
      _
    $region23: #{tpu_custom_call.1} parent=1 // pred_check_branch
      %58 = sbr.rel (0) target = $region25
    $region24: #{tpu_custom_call.1} parent=1 // pred_region
      %60 = dma.done [#allocation3], 1024
    $region25: #{tpu_custom_call.1} parent=1 // pred_fallthru
      _
    // Predicated region
    $region26: #{tpu_custom_call.1} parent=1 // pred_check
      _
    $region27: #{tpu_custom_call.1} parent=1 // pred_check_branch
      %62 = sbr.rel (0) target = $region29
    $region28: #{tpu_custom_call.1} parent=1 // pred_region
      %64 = dma.done [#allocation6], 8192
    $region29: #{tpu_custom_call.1} parent=1 // pred_fallthru
      _
    // Predicated region
    $region30: #{tpu_custom_call.1} parent=1 // pred_check
      _
    $region31: #{tpu_custom_call.1} parent=1 // pred_check_branch
      %66 = sbr.rel (0) target = $region33
    $region32: #{tpu_custom_call.1} parent=1 // pred_region
      %68 = dma.done [#allocation6], 1024
    $region33: #{tpu_custom_call.1} parent=1 // pred_fallthru
      _
    %v69 = vld [vmem:[#allocation2] sm:$0xff]
    %v70 = vld [vmem:[#allocation2 + $0x8] sm:$0xff]
    %v71 = vld [vmem:[#allocation2 + $0x10] sm:$0xff]
    %v72 = vld [vmem:[#allocation2 + $0x18] sm:$0xff]
    %v73 = vld [vmem:[#allocation2 + $0x20] sm:$0xff]
    %v74 = vld [vmem:[#allocation2 + $0x28] sm:$0xff]
    %v75 = vld [vmem:[#allocation2 + $0x30] sm:$0xff]
    %v76 = vld [vmem:[#allocation2 + $0x38] sm:$0xff]
    %v77 = vpack.c.bf16 %v69, %v69
    %v78 = vpack.c.bf16 %v70, %v70
    %v79 = vpack.c.bf16 %v71, %v71
    %v80 = vpack.c.bf16 %v72, %v72
    %v81 = vpack.c.bf16 %v73, %v73
    %v82 = vpack.c.bf16 %v74, %v74
    %v83 = vpack.c.bf16 %v75, %v75
    %v84 = vpack.c.bf16 %v76, %v76
    %v85 = vld [vmem:[#allocation5] sm:$0xf]
    %v86 = vld [vmem:[#allocation5 + $0x4] sm:$0xf]
    %v87 = vld [vmem:[#allocation5 + $0x8] sm:$0xf]
    %v88 = vld [vmem:[#allocation5 + $0xc] sm:$0xf]
    %v89 = vld [vmem:[#allocation5 + $0x10] sm:$0xf]
    %v90 = vld [vmem:[#allocation5 + $0x14] sm:$0xf]
    %v91 = vld [vmem:[#allocation5 + $0x18] sm:$0xf]
    %v92 = vld [vmem:[#allocation5 + $0x1c] sm:$0xf]
    %v93 = vld [vmem:[#allocation5 + $0x20] sm:$0xf]
    %v94 = vld [vmem:[#allocation5 + $0x24] sm:$0xf]
    %v95 = vld [vmem:[#allocation5 + $0x28] sm:$0xf]
    %v96 = vld [vmem:[#allocation5 + $0x2c] sm:$0xf]
    %v97 = vld [vmem:[#allocation5 + $0x30] sm:$0xf]
    %v98 = vld [vmem:[#allocation5 + $0x34] sm:$0xf]
    %v99 = vld [vmem:[#allocation5 + $0x38] sm:$0xf]
    %v100 = vld [vmem:[#allocation5 + $0x3c] sm:$0xf]
    %v101 = vld [vmem:[#allocation5 + $0x40] sm:$0xf]
    %v102 = vld [vmem:[#allocation5 + $0x44] sm:$0xf]
    %v103 = vld [vmem:[#allocation5 + $0x48] sm:$0xf]
    %v104 = vld [vmem:[#allocation5 + $0x4c] sm:$0xf]
    %v105 = vld [vmem:[#allocation5 + $0x50] sm:$0xf]
    %v106 = vld [vmem:[#allocation5 + $0x54] sm:$0xf]
    %v107 = vld [vmem:[#allocation5 + $0x58] sm:$0xf]
    %v108 = vld [vmem:[#allocation5 + $0x5c] sm:$0xf]
    %v109 = vld [vmem:[#allocation5 + $0x60] sm:$0xf]
    %v110 = vld [vmem:[#allocation5 + $0x64] sm:$0xf]
    %v111 = vld [vmem:[#allocation5 + $0x68] sm:$0xf]
    %v112 = vld [vmem:[#allocation5 + $0x6c] sm:$0xf]
    %v113 = vld [vmem:[#allocation5 + $0x70] sm:$0xf]
    %v114 = vld [vmem:[#allocation5 + $0x74] sm:$0xf]
    %v115 = vld [vmem:[#allocation5 + $0x78] sm:$0xf]
    %v116 = vld [vmem:[#allocation5 + $0x7c] sm:$0xf]
    %v117 = vld [vmem:[#allocation5 + $0x80] sm:$0xf]
    %v118 = vld [vmem:[#allocation5 + $0x84] sm:$0xf]
    %v119 = vld [vmem:[#allocation5 + $0x88] sm:$0xf]
    %v120 = vld [vmem:[#allocation5 + $0x8c] sm:$0xf]
    %v121 = vld [vmem:[#allocation5 + $0x90] sm:$0xf]
    %v122 = vld [vmem:[#allocation5 + $0x94] sm:$0xf]
    %v123 = vld [vmem:[#allocation5 + $0x98] sm:$0xf]
    %v124 = vld [vmem:[#allocation5 + $0x9c] sm:$0xf]
    %v125 = vld [vmem:[#allocation5 + $0xa0] sm:$0xf]
    %v126 = vld [vmem:[#allocation5 + $0xa4] sm:$0xf]
    %v127 = vld [vmem:[#allocation5 + $0xa8] sm:$0xf]
    %v128 = vld [vmem:[#allocation5 + $0xac] sm:$0xf]
    %v129 = vld [vmem:[#allocation5 + $0xb0] sm:$0xf]
    %v130 = vld [vmem:[#allocation5 + $0xb4] sm:$0xf]
    %v131 = vld [vmem:[#allocation5 + $0xb8] sm:$0xf]
    %v132 = vld [vmem:[#allocation5 + $0xbc] sm:$0xf]
    %v133 = vld [vmem:[#allocation5 + $0xc0] sm:$0xf]
    %v134 = vld [vmem:[#allocation5 + $0xc4] sm:$0xf]
    %v135 = vld [vmem:[#allocation5 + $0xc8] sm:$0xf]
    %v136 = vld [vmem:[#allocation5 + $0xcc] sm:$0xf]
    %v137 = vld [vmem:[#allocation5 + $0xd0] sm:$0xf]
    %v138 = vld [vmem:[#allocation5 + $0xd4] sm:$0xf]
    %v139 = vld [vmem:[#allocation5 + $0xd8] sm:$0xf]
    %v140 = vld [vmem:[#allocation5 + $0xdc] sm:$0xf]
    %v141 = vld [vmem:[#allocation5 + $0xe0] sm:$0xf]
    %v142 = vld [vmem:[#allocation5 + $0xe4] sm:$0xf]
    %v143 = vld [vmem:[#allocation5 + $0xe8] sm:$0xf]
    %v144 = vld [vmem:[#allocation5 + $0xec] sm:$0xf]
    %v145 = vld [vmem:[#allocation5 + $0xf0] sm:$0xf]
    %v146 = vld [vmem:[#allocation5 + $0xf4] sm:$0xf]
    %v147 = vld [vmem:[#allocation5 + $0xf8] sm:$0xf]
    %v148 = vld [vmem:[#allocation5 + $0xfc] sm:$0xf]
    %v149 = vld [vmem:[#allocation5 + $0x100] sm:$0xf]
    %v150 = vld [vmem:[#allocation5 + $0x104] sm:$0xf]
    %v151 = vld [vmem:[#allocation5 + $0x108] sm:$0xf]
    %v152 = vld [vmem:[#allocation5 + $0x10c] sm:$0xf]
    %v153 = vld [vmem:[#allocation5 + $0x110] sm:$0xf]
    %v154 = vld [vmem:[#allocation5 + $0x114] sm:$0xf]
    %v155 = vld [vmem:[#allocation5 + $0x118] sm:$0xf]
    %v156 = vld [vmem:[#allocation5 + $0x11c] sm:$0xf]
    %v157 = vld [vmem:[#allocation5 + $0x120] sm:$0xf]
    %v158 = vld [vmem:[#allocation5 + $0x124] sm:$0xf]
    %v159 = vld [vmem:[#allocation5 + $0x128] sm:$0xf]
    %v160 = vld [vmem:[#allocation5 + $0x12c] sm:$0xf]
    %v161 = vld [vmem:[#allocation5 + $0x130] sm:$0xf]
    %v162 = vld [vmem:[#allocation5 + $0x134] sm:$0xf]
    %v163 = vld [vmem:[#allocation5 + $0x138] sm:$0xf]
    %v164 = vld [vmem:[#allocation5 + $0x13c] sm:$0xf]
    %v165 = vld [vmem:[#allocation5 + $0x140] sm:$0xf]
    %v166 = vld [vmem:[#allocation5 + $0x144] sm:$0xf]
    %v167 = vld [vmem:[#allocation5 + $0x148] sm:$0xf]
    %v168 = vld [vmem:[#allocation5 + $0x14c] sm:$0xf]
    %v169 = vld [vmem:[#allocation5 + $0x150] sm:$0xf]
    %v170 = vld [vmem:[#allocation5 + $0x154] sm:$0xf]
    %v171 = vld [vmem:[#allocation5 + $0x158] sm:$0xf]
    %v172 = vld [vmem:[#allocation5 + $0x15c] sm:$0xf]
    %v173 = vld [vmem:[#allocation5 + $0x160] sm:$0xf]
    %v174 = vld [vmem:[#allocation5 + $0x164] sm:$0xf]
    %v175 = vld [vmem:[#allocation5 + $0x168] sm:$0xf]
    %v176 = vld [vmem:[#allocation5 + $0x16c] sm:$0xf]
    %v177 = vld [vmem:[#allocation5 + $0x170] sm:$0xf]
    %v178 = vld [vmem:[#allocation5 + $0x174] sm:$0xf]
    %v179 = vld [vmem:[#allocation5 + $0x178] sm:$0xf]
    %v180 = vld [vmem:[#allocation5 + $0x17c] sm:$0xf]
    %v181 = vld [vmem:[#allocation5 + $0x180] sm:$0xf]
    %v182 = vld [vmem:[#allocation5 + $0x184] sm:$0xf]
    %v183 = vld [vmem:[#allocation5 + $0x188] sm:$0xf]
    %v184 = vld [vmem:[#allocation5 + $0x18c] sm:$0xf]
    %v185 = vld [vmem:[#allocation5 + $0x190] sm:$0xf]
    %v186 = vld [vmem:[#allocation5 + $0x194] sm:$0xf]
    %v187 = vld [vmem:[#allocation5 + $0x198] sm:$0xf]
    %v188 = vld [vmem:[#allocation5 + $0x19c] sm:$0xf]
    %v189 = vld [vmem:[#allocation5 + $0x1a0] sm:$0xf]
    %v190 = vld [vmem:[#allocation5 + $0x1a4] sm:$0xf]
    %v191 = vld [vmem:[#allocation5 + $0x1a8] sm:$0xf]
    %v192 = vld [vmem:[#allocation5 + $0x1ac] sm:$0xf]
    %v193 = vld [vmem:[#allocation5 + $0x1b0] sm:$0xf]
    %v194 = vld [vmem:[#allocation5 + $0x1b4] sm:$0xf]
    %v195 = vld [vmem:[#allocation5 + $0x1b8] sm:$0xf]
    %v196 = vld [vmem:[#allocation5 + $0x1bc] sm:$0xf]
    %v197 = vld [vmem:[#allocation5 + $0x1c0] sm:$0xf]
    %v198 = vld [vmem:[#allocation5 + $0x1c4] sm:$0xf]
    %v199 = vld [vmem:[#allocation5 + $0x1c8] sm:$0xf]
    %v200 = vld [vmem:[#allocation5 + $0x1cc] sm:$0xf]
    %v201 = vld [vmem:[#allocation5 + $0x1d0] sm:$0xf]
    %v202 = vld [vmem:[#allocation5 + $0x1d4] sm:$0xf]
    %v203 = vld [vmem:[#allocation5 + $0x1d8] sm:$0xf]
    %v204 = vld [vmem:[#allocation5 + $0x1dc] sm:$0xf]
    %v205 = vld [vmem:[#allocation5 + $0x1e0] sm:$0xf]
    %v206 = vld [vmem:[#allocation5 + $0x1e4] sm:$0xf]
    %v207 = vld [vmem:[#allocation5 + $0x1e8] sm:$0xf]
    %v208 = vld [vmem:[#allocation5 + $0x1ec] sm:$0xf]
    %v209 = vld [vmem:[#allocation5 + $0x1f0] sm:$0xf]
    %v210 = vld [vmem:[#allocation5 + $0x1f4] sm:$0xf]
    %v211 = vld [vmem:[#allocation5 + $0x1f8] sm:$0xf]
    %v212 = vld [vmem:[#allocation5 + $0x1fc] sm:$0xf]
    %v213 = vld [vmem:[%s2] sm:$0x1]
    %v215 = vperm.slane %v213, 0
    %v345 = vunpack.c.l.b16 %v85
    %v346 = vunpack.c.l.b16 %v86
    %v347 = vunpack.c.l.b16 %v87
    %v348 = vunpack.c.l.b16 %v88
    %v349 = vunpack.c.l.b16 %v89
    %v350 = vunpack.c.l.b16 %v90
    %v351 = vunpack.c.l.b16 %v91
    %v352 = vunpack.c.l.b16 %v92
    %v353 = vunpack.c.l.b16 %v93
    %v354 = vunpack.c.l.b16 %v94
    %v355 = vunpack.c.l.b16 %v95
    %v356 = vunpack.c.l.b16 %v96
    %v357 = vunpack.c.l.b16 %v97
    %v358 = vunpack.c.l.b16 %v98
    %v359 = vunpack.c.l.b16 %v99
    %v360 = vunpack.c.l.b16 %v100
    %v361 = vunpack.c.l.b16 %v101
    %v362 = vunpack.c.l.b16 %v102
    %v363 = vunpack.c.l.b16 %v103
    %v364 = vunpack.c.l.b16 %v104
    %v365 = vunpack.c.l.b16 %v105
    %v366 = vunpack.c.l.b16 %v106
    %v367 = vunpack.c.l.b16 %v107
    %v368 = vunpack.c.l.b16 %v108
    %v369 = vunpack.c.l.b16 %v109
    %v370 = vunpack.c.l.b16 %v110
    %v371 = vunpack.c.l.b16 %v111
    %v372 = vunpack.c.l.b16 %v112
    %v373 = vunpack.c.l.b16 %v113
    %v374 = vunpack.c.l.b16 %v114
    %v375 = vunpack.c.l.b16 %v115
    %v376 = vunpack.c.l.b16 %v116
    %v377 = vunpack.c.l.b16 %v117
    %v378 = vunpack.c.l.b16 %v118
    %v379 = vunpack.c.l.b16 %v119
    %v380 = vunpack.c.l.b16 %v120
    %v381 = vunpack.c.l.b16 %v121
    %v382 = vunpack.c.l.b16 %v122
    %v383 = vunpack.c.l.b16 %v123
    %v384 = vunpack.c.l.b16 %v124
    %v385 = vunpack.c.l.b16 %v125
    %v386 = vunpack.c.l.b16 %v126
    %v387 = vunpack.c.l.b16 %v127
    %v388 = vunpack.c.l.b16 %v128
    %v389 = vunpack.c.l.b16 %v129
    %v390 = vunpack.c.l.b16 %v130
    %v391 = vunpack.c.l.b16 %v131
    %v392 = vunpack.c.l.b16 %v132
    %v393 = vunpack.c.l.b16 %v133
    %v394 = vunpack.c.l.b16 %v134
    %v395 = vunpack.c.l.b16 %v135
    %v396 = vunpack.c.l.b16 %v136
    %v397 = vunpack.c.l.b16 %v137
    %v398 = vunpack.c.l.b16 %v138
    %v399 = vunpack.c.l.b16 %v139
    %v400 = vunpack.c.l.b16 %v140
    %v401 = vunpack.c.l.b16 %v141
    %v402 = vunpack.c.l.b16 %v142
    %v403 = vunpack.c.l.b16 %v143
    %v404 = vunpack.c.l.b16 %v144
    %v405 = vunpack.c.l.b16 %v145
    %v406 = vunpack.c.l.b16 %v146
    %v407 = vunpack.c.l.b16 %v147
    %v408 = vunpack.c.l.b16 %v148
    %v409 = vunpack.c.l.b16 %v149
    %v410 = vunpack.c.l.b16 %v150
    %v411 = vunpack.c.l.b16 %v151
    %v412 = vunpack.c.l.b16 %v152
    %v413 = vunpack.c.l.b16 %v153
    %v414 = vunpack.c.l.b16 %v154
    %v415 = vunpack.c.l.b16 %v155
    %v416 = vunpack.c.l.b16 %v156
    %v417 = vunpack.c.l.b16 %v157
    %v418 = vunpack.c.l.b16 %v158
    %v419 = vunpack.c.l.b16 %v159
    %v420 = vunpack.c.l.b16 %v160
    %v421 = vunpack.c.l.b16 %v161
    %v422 = vunpack.c.l.b16 %v162
    %v423 = vunpack.c.l.b16 %v163
    %v424 = vunpack.c.l.b16 %v164
    %v425 = vunpack.c.l.b16 %v165
    %v426 = vunpack.c.l.b16 %v166
    %v427 = vunpack.c.l.b16 %v167
    %v428 = vunpack.c.l.b16 %v168
    %v429 = vunpack.c.l.b16 %v169
    %v430 = vunpack.c.l.b16 %v170
    %v431 = vunpack.c.l.b16 %v171
    %v432 = vunpack.c.l.b16 %v172
    %v433 = vunpack.c.l.b16 %v173
    %v434 = vunpack.c.l.b16 %v174
    %v435 = vunpack.c.l.b16 %v175
    %v436 = vunpack.c.l.b16 %v176
    %v437 = vunpack.c.l.b16 %v177
    %v438 = vunpack.c.l.b16 %v178
    %v439 = vunpack.c.l.b16 %v179
    %v440 = vunpack.c.l.b16 %v180
    %v441 = vunpack.c.l.b16 %v181
    %v442 = vunpack.c.l.b16 %v182
    %v443 = vunpack.c.l.b16 %v183
    %v444 = vunpack.c.l.b16 %v184
    %v445 = vunpack.c.l.b16 %v185
    %v446 = vunpack.c.l.b16 %v186
    %v447 = vunpack.c.l.b16 %v187
    %v448 = vunpack.c.l.b16 %v188
    %v449 = vunpack.c.l.b16 %v189
    %v450 = vunpack.c.l.b16 %v190
    %v451 = vunpack.c.l.b16 %v191
    %v452 = vunpack.c.l.b16 %v192
    %v453 = vunpack.c.l.b16 %v193
    %v454 = vunpack.c.l.b16 %v194
    %v455 = vunpack.c.l.b16 %v195
    %v456 = vunpack.c.l.b16 %v196
    %v457 = vunpack.c.l.b16 %v197
    %v458 = vunpack.c.l.b16 %v198
    %v459 = vunpack.c.l.b16 %v199
    %v460 = vunpack.c.l.b16 %v200
    %v461 = vunpack.c.l.b16 %v201
    %v462 = vunpack.c.l.b16 %v202
    %v463 = vunpack.c.l.b16 %v203
    %v464 = vunpack.c.l.b16 %v204
    %v465 = vunpack.c.l.b16 %v205
    %v466 = vunpack.c.l.b16 %v206
    %v467 = vunpack.c.l.b16 %v207
    %v468 = vunpack.c.l.b16 %v208
    %v469 = vunpack.c.l.b16 %v209
    %v470 = vunpack.c.l.b16 %v210
    %v471 = vunpack.c.l.b16 %v211
    %v472 = vunpack.c.l.b16 %v212
    %v473 = vpack.c.b16 %v346, %v345
    %v474 = vpack.c.b16 %v348, %v347
    %v475 = vpack.c.b16 %v350, %v349
    %v476 = vpack.c.b16 %v352, %v351
    %v477 = vpack.c.b16 %v354, %v353
    %v478 = vpack.c.b16 %v356, %v355
    %v479 = vpack.c.b16 %v358, %v357
    %v480 = vpack.c.b16 %v360, %v359
    %v481 = vpack.c.b16 %v362, %v361
    %v482 = vpack.c.b16 %v364, %v363
    %v483 = vpack.c.b16 %v366, %v365
    %v484 = vpack.c.b16 %v368, %v367
    %v485 = vpack.c.b16 %v370, %v369
    %v486 = vpack.c.b16 %v372, %v371
    %v487 = vpack.c.b16 %v374, %v373
    %v488 = vpack.c.b16 %v376, %v375
    %v489 = vpack.c.b16 %v378, %v377
    %v490 = vpack.c.b16 %v380, %v379
    %v491 = vpack.c.b16 %v382, %v381
    %v492 = vpack.c.b16 %v384, %v383
    %v493 = vpack.c.b16 %v386, %v385
    %v494 = vpack.c.b16 %v388, %v387
    %v495 = vpack.c.b16 %v390, %v389
    %v496 = vpack.c.b16 %v392, %v391
    %v497 = vpack.c.b16 %v394, %v393
    %v498 = vpack.c.b16 %v396, %v395
    %v499 = vpack.c.b16 %v398, %v397
    %v500 = vpack.c.b16 %v400, %v399
    %v501 = vpack.c.b16 %v402, %v401
    %v502 = vpack.c.b16 %v404, %v403
    %v503 = vpack.c.b16 %v406, %v405
    %v504 = vpack.c.b16 %v408, %v407
    %v505 = vpack.c.b16 %v410, %v409
    %v506 = vpack.c.b16 %v412, %v411
    %v507 = vpack.c.b16 %v414, %v413
    %v508 = vpack.c.b16 %v416, %v415
    %v509 = vpack.c.b16 %v418, %v417
    %v510 = vpack.c.b16 %v420, %v419
    %v511 = vpack.c.b16 %v422, %v421
    %v512 = vpack.c.b16 %v424, %v423
    %v513 = vpack.c.b16 %v426, %v425
    %v514 = vpack.c.b16 %v428, %v427
    %v515 = vpack.c.b16 %v430, %v429
    %v516 = vpack.c.b16 %v432, %v431
    %v517 = vpack.c.b16 %v434, %v433
    %v518 = vpack.c.b16 %v436, %v435
    %v519 = vpack.c.b16 %v438, %v437
    %v520 = vpack.c.b16 %v440, %v439
    %v521 = vpack.c.b16 %v442, %v441
    %v522 = vpack.c.b16 %v444, %v443
    %v523 = vpack.c.b16 %v446, %v445
    %v524 = vpack.c.b16 %v448, %v447
    %v525 = vpack.c.b16 %v450, %v449
    %v526 = vpack.c.b16 %v452, %v451
    %v527 = vpack.c.b16 %v454, %v453
    %v528 = vpack.c.b16 %v456, %v455
    %v529 = vpack.c.b16 %v458, %v457
    %v530 = vpack.c.b16 %v460, %v459
    %v531 = vpack.c.b16 %v462, %v461
    %v532 = vpack.c.b16 %v464, %v463
    %v533 = vpack.c.b16 %v466, %v465
    %v534 = vpack.c.b16 %v468, %v467
    %v535 = vpack.c.b16 %v470, %v469
    %v536 = vpack.c.b16 %v472, %v471
    %601 = vmatpush.bf16.msra.mxu0 %v480
    %602 = vmatpush.bf16.msra.mxu0 %v479
    %603 = vmatpush.bf16.msra.mxu0 %v478
    %604 = vmatpush.bf16.msra.mxu0 %v477
    %605 = vmatpush.bf16.msra.mxu0 %v476
    %606 = vmatpush.bf16.msra.mxu0 %v475
    %607 = vmatpush.bf16.msra.mxu0 %v474
    %608 = vmatpush.bf16.msra.mxu0 %v473
    %609 = vmatmul.bf16.gmra.mxu0 %v77
    %v610 = vpop.f32.mrf.mxu0
    %v611 = vadd.f32 %v215, %v610
    %v612 = vpop.f32.mrf.mxu0
    %613 = vdwg.mxu0
    %614 = vmatpush.bf16.msra.mxu0 %v488
    %615 = vmatpush.bf16.msra.mxu0 %v487
    %616 = vmatpush.bf16.msra.mxu0 %v486
    %617 = vmatpush.bf16.msra.mxu0 %v485
    %618 = vmatpush.bf16.msra.mxu0 %v484
    %619 = vmatpush.bf16.msra.mxu0 %v483
    %620 = vmatpush.bf16.msra.mxu0 %v482
    %621 = vmatpush.bf16.msra.mxu0 %v481
    %622 = vmatmul.bf16.gmra.mxu0 %v78
    %v623 = vpop.f32.mrf.mxu0
    %v624 = vadd.f32 %v611, %v623
    %v625 = vpop.f32.mrf.mxu0
    %626 = vdwg.mxu0
    %627 = vmatpush.bf16.msra.mxu0 %v496
    %628 = vmatpush.bf16.msra.mxu0 %v495
    %629 = vmatpush.bf16.msra.mxu0 %v494
    %630 = vmatpush.bf16.msra.mxu0 %v493
    %631 = vmatpush.bf16.msra.mxu0 %v492
    %632 = vmatpush.bf16.msra.mxu0 %v491
    %633 = vmatpush.bf16.msra.mxu0 %v490
    %634 = vmatpush.bf16.msra.mxu0 %v489
    %635 = vmatmul.bf16.gmra.mxu0 %v79
    %v636 = vpop.f32.mrf.mxu0
    %v637 = vadd.f32 %v624, %v636
    %v638 = vpop.f32.mrf.mxu0
    %639 = vdwg.mxu0
    %640 = vmatpush.bf16.msra.mxu0 %v504
    %641 = vmatpush.bf16.msra.mxu0 %v503
    %642 = vmatpush.bf16.msra.mxu0 %v502
    %643 = vmatpush.bf16.msra.mxu0 %v501
    %644 = vmatpush.bf16.msra.mxu0 %v500
    %645 = vmatpush.bf16.msra.mxu0 %v499
    %646 = vmatpush.bf16.msra.mxu0 %v498
    %647 = vmatpush.bf16.msra.mxu0 %v497
    %648 = vmatmul.bf16.gmra.mxu0 %v80
    %v649 = vpop.f32.mrf.mxu0
    %v650 = vadd.f32 %v637, %v649
    %v651 = vpop.f32.mrf.mxu0
    %652 = vdwg.mxu0
    %653 = vmatpush.bf16.msra.mxu0 %v512
    %654 = vmatpush.bf16.msra.mxu0 %v511
    %655 = vmatpush.bf16.msra.mxu0 %v510
    %656 = vmatpush.bf16.msra.mxu0 %v509
    %657 = vmatpush.bf16.msra.mxu0 %v508
    %658 = vmatpush.bf16.msra.mxu0 %v507
    %659 = vmatpush.bf16.msra.mxu0 %v506
    %660 = vmatpush.bf16.msra.mxu0 %v505
    %661 = vmatmul.bf16.gmra.mxu0 %v81
    %v662 = vpop.f32.mrf.mxu0
    %v663 = vadd.f32 %v650, %v662
    %v664 = vpop.f32.mrf.mxu0
    %665 = vdwg.mxu0
    %666 = vmatpush.bf16.msra.mxu0 %v520
    %667 = vmatpush.bf16.msra.mxu0 %v519
    %668 = vmatpush.bf16.msra.mxu0 %v518
    %669 = vmatpush.bf16.msra.mxu0 %v517
    %670 = vmatpush.bf16.msra.mxu0 %v516
    %671 = vmatpush.bf16.msra.mxu0 %v515
    %672 = vmatpush.bf16.msra.mxu0 %v514
    %673 = vmatpush.bf16.msra.mxu0 %v513
    %674 = vmatmul.bf16.gmra.mxu0 %v82
    %v675 = vpop.f32.mrf.mxu0
    %v676 = vadd.f32 %v663, %v675
    %v677 = vpop.f32.mrf.mxu0
    %678 = vdwg.mxu0
    %679 = vmatpush.bf16.msra.mxu0 %v528
    %680 = vmatpush.bf16.msra.mxu0 %v527
    %681 = vmatpush.bf16.msra.mxu0 %v526
    %682 = vmatpush.bf16.msra.mxu0 %v525
    %683 = vmatpush.bf16.msra.mxu0 %v524
    %684 = vmatpush.bf16.msra.mxu0 %v523
    %685 = vmatpush.bf16.msra.mxu0 %v522
    %686 = vmatpush.bf16.msra.mxu0 %v521
    %687 = vmatmul.bf16.gmra.mxu0 %v83
    %v688 = vpop.f32.mrf.mxu0
    %v689 = vadd.f32 %v676, %v688
    %v690 = vpop.f32.mrf.mxu0
    %691 = vdwg.mxu0
    %692 = vmatpush.bf16.msra.mxu0 %v536
    %693 = vmatpush.bf16.msra.mxu0 %v535
    %694 = vmatpush.bf16.msra.mxu0 %v534
    %695 = vmatpush.bf16.msra.mxu0 %v533
    %696 = vmatpush.bf16.msra.mxu0 %v532
    %697 = vmatpush.bf16.msra.mxu0 %v531
    %698 = vmatpush.bf16.msra.mxu0 %v530
    %699 = vmatpush.bf16.msra.mxu0 %v529
    %700 = vmatmul.bf16.gmra.mxu0 %v84
    %v701 = vpop.f32.mrf.mxu0
    %v702 = vadd.f32 %v689, %v701
    %v703 = vpop.f32.mrf.mxu0
    %704 = vdwg.mxu0
    %v705 = vmax.f32 %v702, 0.0
    %706 = vst [vmem:[#allocation8] sm:$0xff] %v705
    %v707 = vpack.c.bf16 %v705, %v705
    %v708 = vld [vmem:[#allocation7] sm:$0xf]
    %v709 = vld [vmem:[#allocation7 + $0x4] sm:$0xf]
    %v710 = vld [vmem:[#allocation7 + $0x8] sm:$0xf]
    %v711 = vld [vmem:[#allocation7 + $0xc] sm:$0xf]
    %v712 = vld [vmem:[#allocation7 + $0x10] sm:$0xf]
    %v713 = vld [vmem:[#allocation7 + $0x14] sm:$0xf]
    %v714 = vld [vmem:[#allocation7 + $0x18] sm:$0xf]
    %v715 = vld [vmem:[#allocation7 + $0x1c] sm:$0xf]
    %v716 = vld [vmem:[#allocation7 + $0x20] sm:$0xf]
    %v717 = vld [vmem:[#allocation7 + $0x24] sm:$0xf]
    %v718 = vld [vmem:[#allocation7 + $0x28] sm:$0xf]
    %v719 = vld [vmem:[#allocation7 + $0x2c] sm:$0xf]
    %v720 = vld [vmem:[#allocation7 + $0x30] sm:$0xf]
    %v721 = vld [vmem:[#allocation7 + $0x34] sm:$0xf]
    %v722 = vld [vmem:[#allocation7 + $0x38] sm:$0xf]
    %v723 = vld [vmem:[#allocation7 + $0x3c] sm:$0xf]
    %v724 = vld [vmem:[%s4] sm:$0x1]
    %v726 = vperm.slane %v724, 0
    %v744 = vunpack.c.l.b16 %v708
    %v745 = vunpack.c.l.b16 %v709
    %v746 = vunpack.c.l.b16 %v710
    %v747 = vunpack.c.l.b16 %v711
    %v748 = vunpack.c.l.b16 %v712
    %v749 = vunpack.c.l.b16 %v713
    %v750 = vunpack.c.l.b16 %v714
    %v751 = vunpack.c.l.b16 %v715
    %v752 = vunpack.c.l.b16 %v716
    %v753 = vunpack.c.l.b16 %v717
    %v754 = vunpack.c.l.b16 %v718
    %v755 = vunpack.c.l.b16 %v719
    %v756 = vunpack.c.l.b16 %v720
    %v757 = vunpack.c.l.b16 %v721
    %v758 = vunpack.c.l.b16 %v722
    %v759 = vunpack.c.l.b16 %v723
    %v760 = vpack.c.b16 %v745, %v744
    %v761 = vpack.c.b16 %v747, %v746
    %v762 = vpack.c.b16 %v749, %v748
    %v763 = vpack.c.b16 %v751, %v750
    %v764 = vpack.c.b16 %v753, %v752
    %v765 = vpack.c.b16 %v755, %v754
    %v766 = vpack.c.b16 %v757, %v756
    %v767 = vpack.c.b16 %v759, %v758
    %776 = vmatpush.bf16.msra.mxu0 %v767
    %777 = vmatpush.bf16.msra.mxu0 %v766
    %778 = vmatpush.bf16.msra.mxu0 %v765
    %779 = vmatpush.bf16.msra.mxu0 %v764
    %780 = vmatpush.bf16.msra.mxu0 %v763
    %781 = vmatpush.bf16.msra.mxu0 %v762
    %782 = vmatpush.bf16.msra.mxu0 %v761
    %783 = vmatpush.bf16.msra.mxu0 %v760
    %784 = vmatmul.bf16.gmra.mxu0 %v707
    %v785 = vpop.f32.mrf.mxu0
    %v786 = vadd.f32 %v726, %v785
    %v787 = vpop.f32.mrf.mxu0
    %788 = vdwg.mxu0
    %789 = vst [vmem:[#allocation9] sm:$0xff] %v786
    // Predicated region
    $region34: #{tpu_custom_call.1} parent=1 // pred_check
      _
    $region35: #{tpu_custom_call.1} parent=1 // pred_check_branch
      %791 = sbr.rel (0) target = $region37
    $region36: #{tpu_custom_call.1} parent=1 // pred_region
      %793 = vsyncadd [#allocation4], 0
      %s795 = sshll.u32 [#allocation8], 4
      %s796 = int_to_ptr.vmem [resolvable:$true] %s795
      %s797 = sshll.u32 %s5, 4
      %s798 = int_to_ptr.hbm [resolvable:$true] %s797
      %800 = dma.vmem_to_hbm [thread:$0]  %s796, 128, %s798, [#allocation4]
    $region37: #{tpu_custom_call.1} parent=1 // pred_fallthru
      _
    // Predicated region
    $region38: #{tpu_custom_call.1} parent=1 // pred_check
      _
    $region39: #{tpu_custom_call.1} parent=1 // pred_check_branch
      %802 = sbr.rel (0) target = $region41
    $region40: #{tpu_custom_call.1} parent=1 // pred_region
      %804 = vsyncadd [#allocation10], 0
      %s806 = sshll.u32 [#allocation9], 4
      %s807 = int_to_ptr.vmem [resolvable:$true] %s806
      %s808 = sshll.u32 %s6, 4
      %s809 = int_to_ptr.hbm [resolvable:$true] %s808
      %811 = dma.vmem_to_hbm [thread:$0]  %s807, 128, %s809, [#allocation10]
    $region41: #{tpu_custom_call.1} parent=1 // pred_fallthru
      _
    // Predicated region
    $region42: #{tpu_custom_call.1} parent=1 // pred_check
      _
    $region43: #{tpu_custom_call.1} parent=1 // pred_check_branch
      %813 = sbr.rel (0) target = $region45
    $region44: #{tpu_custom_call.1} parent=1 // pred_region
      %815 = dma.done [#allocation4], 128
    $region45: #{tpu_custom_call.1} parent=1 // pred_fallthru
      _
    // Predicated region
    $region46: #{tpu_custom_call.1} parent=1 // pred_check
      _
    $region47: #{tpu_custom_call.1} parent=1 // pred_check_branch
      %817 = sbr.rel (0) target = $region49
    $region48: #{tpu_custom_call.1} parent=1 // pred_region
      %819 = dma.done [#allocation10], 128
    $region49: #{tpu_custom_call.1} parent=1 // pred_fallthru
      _
    %820 = vsyncpa [#allocation3], 1
    %821 = vsyncpa [#allocation6], 1
    %822 = vsyncpa [#allocation4], 1
    %823 = vsyncpa [#allocation10], 1

</llo_original>
